<compile_context>
chip_gen: v7x
topology: tpu7x:2x2x1
jax: 0.10.0
libtpu: 0.0.40
codegen_flags: <defaults>
</compile_context>

<pallas_src>
import jax
import jax.numpy as jnp
from jax import lax
from jax.experimental import pallas as pl
from jax.experimental.pallas import tpu as pltpu


_CR = 128  # rows per inner chunk (keeps h1/h2 within the vreg file)


def _mlp_kernel(x_ref, w1_ref, b1_ref, w2_ref, b2_ref, w3t_ref, b3t_ref, o_ref):
    # x_ref : (TILE_B, d_in)            streamed batch tile
    # w1    : (d_in, 128), b1: (1, 128)
    # w2    : (128, 64),   b2: (1, 64)
    # w3t   : (out, 64),   b3t: (out, 1)   (pre-transposed in the wrapper)
    # o_ref : (out, TILE_B)              transposed, lane-dense output block
    w1 = w1_ref[...]
    b1 = b1_ref[...]
    w2 = w2_ref[...]
    b2 = b2_ref[...]
    w3t = w3t_ref[...]
    b3t = b3t_ref[...]

    tile = x_ref.shape[0]
    n_chunks = tile // _CR  # static

    def body(c, carry):
        r = pl.multiple_of(c * _CR, _CR)
        xc = x_ref[pl.ds(r, _CR), :]                                   # (CR, d_in)
        h1 = jnp.dot(xc, w1, preferred_element_type=jnp.float32) + b1  # (CR, 128)
        h1 = jnp.maximum(h1, 0.0)
        h2 = jnp.dot(h1, w2, preferred_element_type=jnp.float32) + b2  # (CR, 64)
        h2 = jnp.maximum(h2, 0.0)
        # (out, CR) = w3t (out,64) · h2 (CR,64)ᵀ  — standard A·Bᵀ MXU pattern,
        # gives the transposed (lane-dense) output chunk directly.
        out_t = lax.dot_general(
            w3t, h2, (((1,), (1,)), ((), ())),
            preferred_element_type=jnp.float32) + b3t                  # (out, CR)
        o_ref[:, pl.ds(r, _CR)] = out_t.astype(o_ref.dtype)            # unmasked 128-lane stores
        return carry

    lax.fori_loop(0, n_chunks, body, 0, unroll=True)


def _choose_tiling(B, tile_cap):
    """Pick a 128-multiple batch tile <= tile_cap with >=2 grid steps for B>128."""
    tile_cap = max(_CR, (tile_cap // _CR) * _CR)
    b_pad = pl.cdiv(B, _CR) * _CR
    if b_pad <= _CR:
        return _CR, _CR
    n_steps = max(2, pl.cdiv(b_pad, tile_cap))          # >=2 -> both TCs on v7x
    tile = pl.cdiv(b_pad // _CR, n_steps) * _CR
    b_pad = pl.cdiv(B, tile) * tile
    return tile, b_pad


def mlp_forward(x, params, *, tile_cap=4096):
    """x: (B, seq_len, input_dim) float32. Returns (B, output_size) float32."""
    w1, b1, w2, b2, w3, b3 = params
    B = x.shape[0]
    x_flat = x.reshape(B, -1)                     # nn.Flatten (view-level glue)
    d_in = x_flat.shape[1]
    out_size = w3.shape[1]
    assert w1.shape[0] == d_in

    # Tiny one-time weight prep (stay resident in VMEM across grid steps).
    b1r = b1.reshape(1, -1).astype(jnp.float32)
    b2r = b2.reshape(1, -1).astype(jnp.float32)
    w3t = jnp.asarray(w3).T                       # (out, 64)
    b3t = b3.reshape(-1, 1).astype(jnp.float32)   # (out, 1)

    tile, b_pad = _choose_tiling(B, tile_cap)
    assert tile % _CR == 0
    if b_pad != B:
        # Only hit when B is not a multiple of the (128-aligned) tile;
        # 128-aligned streaming batches skip this extra HBM pass.
        x_flat = jnp.pad(x_flat, ((0, b_pad - B), (0, 0)))

    grid = (b_pad // tile,)

    def resident(a):
        return pl.BlockSpec(a.shape, lambda i: (0,) * a.ndim)

    out_t = pl.pallas_call(
        _mlp_kernel,
        out_shape=jax.ShapeDtypeStruct((out_size, b_pad), jnp.float32),
        grid=grid,
        in_specs=[
            pl.BlockSpec((tile, d_in), lambda i: (i, 0)),   # streamed x tiles
            resident(w1), resident(b1r),
            resident(w2), resident(b2r),
            resident(w3t), resident(b3t),
        ],
        out_specs=pl.BlockSpec((out_size, tile), lambda i: (0, i)),
        compiler_params=pltpu.CompilerParams(
            dimension_semantics=("parallel",),      # shard batch grid over TCs (v7x)
            vmem_limit_bytes=32 * 1024 * 1024,      # ~4.5 MiB/step actually used
        ),
    )(x_flat, w1, b1r, w2, b2r, w3t, b3t)

    out = out_t.T                                   # (b_pad, out) — tiny copy
    return out[:B] if b_pad != B else out


def init_params(key, input_dim=2, seq_len=8, output_size=8):
    """nn.Linear-style U(-1/sqrt(fan_in), 1/sqrt(fan_in)) init.
    Weights stored as (in_features, out_features); biases as (1, out_features)."""
    d_in = input_dim * seq_len
    dims = [(d_in, 128), (128, 64), (64, output_size)]
    params = []
    for (fan_in, fan_out) in dims:
        key, kw, kb = jax.random.split(key, 3)
        bound = 1.0 / jnp.sqrt(jnp.float32(fan_in))
        w = jax.random.uniform(kw, (fan_in, fan_out), jnp.float32, -bound, bound)
        b = jax.random.uniform(kb, (1, fan_out), jnp.float32, -bound, bound)
        params += [w, b]
    return tuple(params)


def mlp_reference(x, params):
    w1, b1, w2, b2, w3, b3 = params
    h = x.reshape(x.shape[0], -1)
    h = jnp.maximum(h @ w1 + b1, 0.0)
    h = jnp.maximum(h @ w2 + b2, 0.0)
    return h @ w3 + b3


if __name__ == "__main__":
    key = jax.random.PRNGKey(0)
    key_x, key_p = jax.random.split(key)

    B, seq_len, input_dim, output_size = 2, 8, 2, 8
    x = jax.random.normal(key_x, (B, seq_len, input_dim), jnp.float32)
    params = init_params(key_p, input_dim, seq_len, output_size)

    # Small-batch path (padded to one 128-row tile, single grid step).
    out = jax.block_until_ready(mlp_forward(x, params))
    ref = mlp_reference(x, params)
    assert out.shape == (B, output_size)
    assert jnp.allclose(out, ref, atol=1e-4, rtol=1e-4)

    # Multi-step pipelined path: B=200 -> padded to 256, 2 grid steps of 128.
    B2 = 200
    key_x2, _ = jax.random.split(key_x)
    x2 = jax.random.normal(key_x2, (B2, seq_len, input_dim), jnp.float32)
    out2 = jax.block_until_ready(mlp_forward(x2, params))
    ref2 = mlp_reference(x2, params)
    assert out2.shape == (B2, output_size)
    assert jnp.allclose(out2, ref2, atol=1e-4, rtol=1e-4)

    # Larger aligned batch: no padding pass, 2 grid steps (both TCs on v7x).
    B3 = 2048
    x3 = jax.random.normal(key_x2, (B3, seq_len, input_dim), jnp.float32)
    out3 = jax.block_until_ready(mlp_forward(x3, params))
    ref3 = mlp_reference(x3, params)
    assert out3.shape == (B3, output_size)
    assert jnp.allclose(out3, ref3, atol=1e-4, rtol=1e-4)

    print("KERNEL_OK")
</pallas_src>

<mosaic_0001>
module attributes {stable_mosaic.version = 11 : i64} {
  func.func @_mlp_kernel(%arg0: i32, %arg1: memref<128x16xf32, #tpu.memory_space<vmem>>, %arg2: memref<16x128xf32, #tpu.memory_space<vmem>>, %arg3: memref<1x128xf32, #tpu.memory_space<vmem>>, %arg4: memref<128x64xf32, #tpu.memory_space<vmem>>, %arg5: memref<1x64xf32, #tpu.memory_space<vmem>>, %arg6: memref<8x64xf32, #tpu.memory_space<vmem>>, %arg7: memref<8x1xf32, #tpu.memory_space<vmem>>, %arg8: memref<8x128xf32, #tpu.memory_space<vmem>>) attributes {dimension_semantics = [#tpu.dimension_semantics<parallel>], iteration_bounds = array<i64: 1>, scalar_prefetch = 0 : i64, scratch_operands = 0 : i64, tpu.core_type = #tpu.core_type<tc>, window_params = [{transform_indices = @transform_0, window_bounds = array<i64: 128, 16>}, {pipeline_mode = #tpu.pipeline_mode<synchronous>, transform_indices = @transform_1, window_bounds = array<i64: 16, 128>}, {pipeline_mode = #tpu.pipeline_mode<synchronous>, transform_indices = @transform_2, window_bounds = array<i64: 1, 128>}, {pipeline_mode = #tpu.pipeline_mode<synchronous>, transform_indices = @transform_3, window_bounds = array<i64: 128, 64>}, {pipeline_mode = #tpu.pipeline_mode<synchronous>, transform_indices = @transform_4, window_bounds = array<i64: 1, 64>}, {pipeline_mode = #tpu.pipeline_mode<synchronous>, transform_indices = @transform_5, window_bounds = array<i64: 8, 64>}, {pipeline_mode = #tpu.pipeline_mode<synchronous>, transform_indices = @transform_6, window_bounds = array<i64: 8, 1>}, {transform_indices = @transform_7, window_bounds = array<i64: 8, 128>}]} {
    %c0 = arith.constant 0 : index
    %c0_0 = arith.constant 0 : index
    %0 = vector.load %arg2[%c0, %c0_0] : memref<16x128xf32, #tpu.memory_space<vmem>>, vector<16x128xf32>
    %c0_1 = arith.constant 0 : index
    %c0_2 = arith.constant 0 : index
    %1 = vector.load %arg3[%c0_1, %c0_2] : memref<1x128xf32, #tpu.memory_space<vmem>>, vector<1x128xf32>
    %c0_3 = arith.constant 0 : index
    %c0_4 = arith.constant 0 : index
    %2 = vector.load %arg4[%c0_3, %c0_4] : memref<128x64xf32, #tpu.memory_space<vmem>>, vector<128x64xf32>
    %c0_5 = arith.constant 0 : index
    %c0_6 = arith.constant 0 : index
    %3 = vector.load %arg5[%c0_5, %c0_6] : memref<1x64xf32, #tpu.memory_space<vmem>>, vector<1x64xf32>
    %c0_7 = arith.constant 0 : index
    %c0_8 = arith.constant 0 : index
    %4 = vector.load %arg6[%c0_7, %c0_8] : memref<8x64xf32, #tpu.memory_space<vmem>>, vector<8x64xf32>
    %c0_9 = arith.constant 0 : index
    %c0_10 = arith.constant 0 : index
    %5 = vector.load %arg7[%c0_9, %c0_10] : memref<8x1xf32, #tpu.memory_space<vmem>>, vector<8x1xf32>
    %c0_i32 = arith.constant 0 : i32
    %c128_i32 = arith.constant 128 : i32
    %6 = arith.muli %c0_i32, %c128_i32 : i32
    %7 = tpu.assume_multiple %6, 128 : i32
    %8 = arith.index_cast %7 : i32 to index
    %c0_11 = arith.constant 0 : index
    %9 = vector.load %arg1[%8, %c0_11] : memref<128x16xf32, #tpu.memory_space<vmem>>, vector<128x16xf32>
    %cst = arith.constant dense<0.000000e+00> : vector<128x128xf32>
    %10 = tpu.matmul %9, %0, %cst {dimension_numbers = #tpu.dot_dimension_numbers<[1], [0], [0], [1], [0, 0, 1, 1], [], []>} : vector<128x16xf32>, vector<16x128xf32>, vector<128x128xf32> -> vector<128x128xf32>
    %11 = vector.broadcast %1 : vector<1x128xf32> to vector<128x128xf32>
    %12 = arith.addf %10, %11 : vector<128x128xf32>
    %cst_12 = arith.constant 0.000000e+00 : f32
    %13 = vector.broadcast %cst_12 : f32 to vector<128x128xf32>
    %14 = arith.maximumf %12, %13 : vector<128x128xf32>
    %cst_13 = arith.constant dense<0.000000e+00> : vector<128x64xf32>
    %15 = tpu.matmul %14, %2, %cst_13 {dimension_numbers = #tpu.dot_dimension_numbers<[1], [0], [0], [1], [0, 0, 1, 1], [], []>} : vector<128x128xf32>, vector<128x64xf32>, vector<128x64xf32> -> vector<128x64xf32>
    %16 = vector.broadcast %3 : vector<1x64xf32> to vector<128x64xf32>
    %17 = arith.addf %15, %16 : vector<128x64xf32>
    %cst_14 = arith.constant 0.000000e+00 : f32
    %18 = vector.broadcast %cst_14 : f32 to vector<128x64xf32>
    %19 = arith.maximumf %17, %18 : vector<128x64xf32>
    %cst_15 = arith.constant dense<0.000000e+00> : vector<8x128xf32>
    %20 = tpu.matmul %4, %19, %cst_15 {dimension_numbers = #tpu.dot_dimension_numbers<[1], [1], [0], [0], [0, 0, 1, 0], [], []>} : vector<8x64xf32>, vector<128x64xf32>, vector<8x128xf32> -> vector<8x128xf32>
    %21 = vector.broadcast %5 : vector<8x1xf32> to vector<8x128xf32>
    %22 = arith.addf %20, %21 : vector<8x128xf32>
    %c0_16 = arith.constant 0 : index
    %23 = arith.index_cast %7 : i32 to index
    %24 = vector.load %arg8[%c0_16, %23] : memref<8x128xf32, #tpu.memory_space<vmem>>, vector<8x128xf32>
    tpu.vector_store %arg8[%c0_16, %23], %22 {strides = array<i32>} : memref<8x128xf32, #tpu.memory_space<vmem>>, vector<8x128xf32>,
    %c1_i32 = arith.constant 1 : i32
    return
  }
  func.func @transform_0(%arg0: i32) -> (i32, i32) {
    %c0_i32 = arith.constant 0 : i32
    %c0_i32_0 = arith.constant 0 : i32
    return %arg0, %c0_i32 : i32, i32
  }
  func.func @transform_1(%arg0: i32) -> (i32, i32) {
    %c0_i32 = arith.constant 0 : i32
    %c0_i32_0 = arith.constant 0 : i32
    %c0_i32_1 = arith.constant 0 : i32
    return %c0_i32, %c0_i32_0 : i32, i32
  }
  func.func @transform_2(%arg0: i32) -> (i32, i32) {
    %c0_i32 = arith.constant 0 : i32
    %c0_i32_0 = arith.constant 0 : i32
    %c0_i32_1 = arith.constant 0 : i32
    return %c0_i32, %c0_i32_0 : i32, i32
  }
  func.func @transform_3(%arg0: i32) -> (i32, i32) {
    %c0_i32 = arith.constant 0 : i32
    %c0_i32_0 = arith.constant 0 : i32
    %c0_i32_1 = arith.constant 0 : i32
    return %c0_i32, %c0_i32_0 : i32, i32
  }
  func.func @transform_4(%arg0: i32) -> (i32, i32) {
    %c0_i32 = arith.constant 0 : i32
    %c0_i32_0 = arith.constant 0 : i32
    %c0_i32_1 = arith.constant 0 : i32
    return %c0_i32, %c0_i32_0 : i32, i32
  }
  func.func @transform_5(%arg0: i32) -> (i32, i32) {
    %c0_i32 = arith.constant 0 : i32
    %c0_i32_0 = arith.constant 0 : i32
    %c0_i32_1 = arith.constant 0 : i32
    return %c0_i32, %c0_i32_0 : i32, i32
  }
  func.func @transform_6(%arg0: i32) -> (i32, i32) {
    %c0_i32 = arith.constant 0 : i32
    %c0_i32_0 = arith.constant 0 : i32
    %c0_i32_1 = arith.constant 0 : i32
    return %c0_i32, %c0_i32_0 : i32, i32
  }
  func.func @transform_7(%arg0: i32) -> (i32, i32) {
    %c0_i32 = arith.constant 0 : i32
    %c0_i32_0 = arith.constant 0 : i32
    return %c0_i32, %arg0 : i32, i32
  }
}

</mosaic_0001>

<llo_original>
// kernel: tpu_custom_call.1
$region0: #{tpu_custom_call.1}
  #allocation0 [shape = 'u32[]', space=smem, size = 0x4, offset = 0x4, fixed_abs, tag = 'smem constant byte address 0x4 - core index']
  #allocation1 [shape = 'u32[144,128]{1,0:T(1,128)}', space=vmem, size = 0x12000, scoped, tag = 'internal scratch']
  %s0 = inlined_call_operand.vmem [shape: f32[128,16], index: 0, kind: input, shape index: {}]
  %s1 = inlined_call_operand.vmem [shape: f32[16,128], index: 1, kind: input, shape index: {}]
  %s2 = inlined_call_operand.vmem [shape: f32[1,128], index: 2, kind: input, shape index: {}]
  %s3 = inlined_call_operand.vmem [shape: f32[128,64], index: 3, kind: input, shape index: {}]
  %s4 = inlined_call_operand.vmem [shape: f32[1,64], index: 4, kind: input, shape index: {}]
  %s5 = inlined_call_operand.vmem [shape: f32[8,64], index: 5, kind: input, shape index: {}]
  %s6 = inlined_call_operand.vmem [shape: f32[8,1], index: 6, kind: input, shape index: {}]
  %s7 = inlined_call_operand.hbm [shape: f32[8,128], index: 7, kind: output, shape index: {}]
  %s8 = sld [smem:[#allocation0]]
  $region38: #{tpu_custom_call.1} parent=0
    _
  %s10 = ssub.s32 1, %s8
  %s11 = scalar_select 0, %s10, %s8
  $region1: #{tpu_custom_call.1} parent=0
    #allocation2 [shape = 'u8[4096]{0}', space=vmem, size = 0x1000, scoped, tag = 'output window, operand 0, single buffered']
    #allocation3 [shape = 's32[1]{0}', space=sflag, size = 0x4, scoped, tag = 'scoped memory for tpu_custom_call.1']
    %12 = vsyncpa [#allocation3], 0
    // Predicated region
    $region2: #{tpu_custom_call.1} parent=1 // pred_check
      _
    $region3: #{tpu_custom_call.1} parent=1 // pred_check_branch
      %14 = sbr.rel (0) target = $region5
    $region4: #{tpu_custom_call.1} parent=1 // pred_region
      _
    $region5: #{tpu_custom_call.1} parent=1 // pred_fallthru
      _
    // Predicated region
    $region6: #{tpu_custom_call.1} parent=1 // pred_check
      _
    $region7: #{tpu_custom_call.1} parent=1 // pred_check_branch
      %16 = sbr.rel (0) target = $region9
    $region8: #{tpu_custom_call.1} parent=1 // pred_region
      _
    $region9: #{tpu_custom_call.1} parent=1 // pred_fallthru
      _
    // Predicated region
    $region10: #{tpu_custom_call.1} parent=1 // pred_check
      _
    $region11: #{tpu_custom_call.1} parent=1 // pred_check_branch
      %18 = sbr.rel (0) target = $region13
    $region12: #{tpu_custom_call.1} parent=1 // pred_region
      _
    $region13: #{tpu_custom_call.1} parent=1 // pred_fallthru
      _
    // Predicated region
    $region14: #{tpu_custom_call.1} parent=1 // pred_check
      _
    $region15: #{tpu_custom_call.1} parent=1 // pred_check_branch
      %20 = sbr.rel (0) target = $region17
    $region16: #{tpu_custom_call.1} parent=1 // pred_region
      _
    $region17: #{tpu_custom_call.1} parent=1 // pred_fallthru
      _
    // Predicated region
    $region18: #{tpu_custom_call.1} parent=1 // pred_check
      _
    $region19: #{tpu_custom_call.1} parent=1 // pred_check_branch
      %22 = sbr.rel (0) target = $region21
    $region20: #{tpu_custom_call.1} parent=1 // pred_region
      _
    $region21: #{tpu_custom_call.1} parent=1 // pred_fallthru
      _
    // Predicated region
    $region22: #{tpu_custom_call.1} parent=1 // pred_check
      _
    $region23: #{tpu_custom_call.1} parent=1 // pred_check_branch
      %24 = sbr.rel (0) target = $region25
    $region24: #{tpu_custom_call.1} parent=1 // pred_region
      _
    $region25: #{tpu_custom_call.1} parent=1 // pred_fallthru
      _
    // Predicated region
    $region26: #{tpu_custom_call.1} parent=1 // pred_check
      _
    $region27: #{tpu_custom_call.1} parent=1 // pred_check_branch
      %26 = sbr.rel (0) target = $region29
    $region28: #{tpu_custom_call.1} parent=1 // pred_region
      _
    $region29: #{tpu_custom_call.1} parent=1 // pred_fallthru
      _
    %v27 = vld [vmem:[%s1] sm:$0xff]
    %v28 = vld [vmem:[%s1 + $0x8] sm:$0xff]
    %v29 = vld [vmem:[%s2] sm:$0x1]
    %v30 = vld [vmem:[%s3] sm:$0xff]
    %v31 = vld [vmem:[%s3 + $0x8] sm:$0xff]
    %v32 = vld [vmem:[%s3 + $0x10] sm:$0xff]
    %v33 = vld [vmem:[%s3 + $0x18] sm:$0xff]
    %v34 = vld [vmem:[%s3 + $0x20] sm:$0xff]
    %v35 = vld [vmem:[%s3 + $0x28] sm:$0xff]
    %v36 = vld [vmem:[%s3 + $0x30] sm:$0xff]
    %v37 = vld [vmem:[%s3 + $0x38] sm:$0xff]
    %v38 = vld [vmem:[%s3 + $0x40] sm:$0xff]
    %v39 = vld [vmem:[%s3 + $0x48] sm:$0xff]
    %v40 = vld [vmem:[%s3 + $0x50] sm:$0xff]
    %v41 = vld [vmem:[%s3 + $0x58] sm:$0xff]
    %v42 = vld [vmem:[%s3 + $0x60] sm:$0xff]
    %v43 = vld [vmem:[%s3 + $0x68] sm:$0xff]
    %v44 = vld [vmem:[%s3 + $0x70] sm:$0xff]
    %v45 = vld [vmem:[%s3 + $0x78] sm:$0xff]
    %v46 = vld [vmem:[%s4] sm:$0x1]
    %v47 = vld [vmem:[%s5] sm:$0xff]
    %v48 = vld [vmem:[%s6] sm:$0xff]
    %v49 = vld [vmem:[%s0] sm:$0xff]
    %v50 = vld [vmem:[%s0 + $0x8] sm:$0xff]
    %v51 = vld [vmem:[%s0 + $0x10] sm:$0xff]
    %v52 = vld [vmem:[%s0 + $0x18] sm:$0xff]
    %v53 = vld [vmem:[%s0 + $0x20] sm:$0xff]
    %v54 = vld [vmem:[%s0 + $0x28] sm:$0xff]
    %v55 = vld [vmem:[%s0 + $0x30] sm:$0xff]
    %v56 = vld [vmem:[%s0 + $0x38] sm:$0xff]
    %v57 = vld [vmem:[%s0 + $0x40] sm:$0xff]
    %v58 = vld [vmem:[%s0 + $0x48] sm:$0xff]
    %v59 = vld [vmem:[%s0 + $0x50] sm:$0xff]
    %v60 = vld [vmem:[%s0 + $0x58] sm:$0xff]
    %v61 = vld [vmem:[%s0 + $0x60] sm:$0xff]
    %v62 = vld [vmem:[%s0 + $0x68] sm:$0xff]
    %v63 = vld [vmem:[%s0 + $0x70] sm:$0xff]
    %v64 = vld [vmem:[%s0 + $0x78] sm:$0xff]
    %v66 = vlaneseq
    %v67 = vshrl.u32 %v66, 7
    %v68 = vsub.s32 0, %v67
    %v69 = vrot.slane %v29, %v68
    %vm71 = vcmask 130048
    %v73 = vsel %vm71, %v49, 0
    %v76 = vsel %vm71, %v50, 0
    %v79 = vsel %vm71, %v51, 0
    %v82 = vsel %vm71, %v52, 0
    %v85 = vsel %vm71, %v53, 0
    %v88 = vsel %vm71, %v54, 0
    %v91 = vsel %vm71, %v55, 0
    %v94 = vsel %vm71, %v56, 0
    %v97 = vsel %vm71, %v57, 0
    %v100 = vsel %vm71, %v58, 0
    %v103 = vsel %vm71, %v59, 0
    %v106 = vsel %vm71, %v60, 0
    %v109 = vsel %vm71, %v61, 0
    %v112 = vsel %vm71, %v62, 0
    %v115 = vsel %vm71, %v63, 0
    %v118 = vsel %vm71, %v64, 0
    %120 = vmatprep.subr.mxu0 0.0
    %121 = vmatpush1.msra.mxu0 %v27
    %122 = vmatprep.subr.mxu0 0.0
    %123 = vmatpush1.msra.mxu0 %v28
    %124 = vmatprep.subr.mxu0 0.0
    %125 = vmatpush1.msra.mxu0 0.0
    %126 = vmatprep.subr.mxu0 0.0
    %127 = vmatpush1.msra.mxu0 0.0
    %128 = vmatprep.subr.mxu0 0.0
    %129 = vmatpush1.msra.mxu0 0.0
    %130 = vmatprep.subr.mxu0 0.0
    %131 = vmatpush1.msra.mxu0 0.0
    %132 = vmatprep.subr.mxu0 0.0
    %133 = vmatpush1.msra.mxu0 0.0
    %134 = vmatprep.subr.mxu0 0.0
    %135 = vmatpush1.msra.mxu0 0.0
    %136 = vmatprep.subr.mxu0 0.0
    %137 = vmatpush1.msra.mxu0 0.0
    %138 = vmatprep.subr.mxu0 0.0
    %139 = vmatpush1.msra.mxu0 0.0
    %140 = vmatprep.subr.mxu0 0.0
    %141 = vmatpush1.msra.mxu0 0.0
    %142 = vmatprep.subr.mxu0 0.0
    %143 = vmatpush1.msra.mxu0 0.0
    %144 = vmatprep.subr.mxu0 0.0
    %145 = vmatpush1.msra.mxu0 0.0
    %146 = vmatprep.subr.mxu0 0.0
    %147 = vmatpush1.msra.mxu0 0.0
    %148 = vmatprep.subr.mxu0 0.0
    %149 = vmatpush1.msra.mxu0 0.0
    %150 = vmatprep.subr.mxu0 0.0
    %151 = vmatpush1.msra.mxu0 0.0
    %152 = vmatprep.subr.mxu0 0.0
    %153 = vmatpush1.msra.mxu0 0.0
    %154 = vmatprep.subr.mxu0 0.0
    %155 = vmatpush1.msra.mxu0 0.0
    %156 = vmatprep.subr.mxu0 0.0
    %157 = vmatpush1.msra.mxu0 0.0
    %158 = vmatprep.subr.mxu0 0.0
    %159 = vmatpush1.msra.mxu0 0.0
    %160 = vmatprep.subr.mxu0 0.0
    %161 = vmatpush1.msra.mxu0 0.0
    %162 = vmatprep.subr.mxu0 0.0
    %163 = vmatpush1.msra.mxu0 0.0
    %164 = vmatprep.subr.mxu0 0.0
    %165 = vmatpush1.msra.mxu0 0.0
    %166 = vmatprep.subr.mxu0 0.0
    %167 = vmatpush1.msra.mxu0 0.0
    %168 = vmatprep.subr.mxu0 0.0
    %169 = vmatpush1.msra.mxu0 0.0
    %170 = vmatprep.subr.mxu0 0.0
    %171 = vmatpush1.msra.mxu0 0.0
    %172 = vmatprep.subr.mxu0 0.0
    %173 = vmatpush1.msra.mxu0 0.0
    %174 = vmatprep.subr.mxu0 0.0
    %175 = vmatpush1.msra.mxu0 0.0
    %176 = vmatprep.subr.mxu0 0.0
    %177 = vmatpush1.msra.mxu0 0.0
    %178 = vmatprep.subr.mxu0 0.0
    %179 = vmatpush1.msra.mxu0 0.0
    %180 = vmatprep.subr.mxu0 0.0
    %181 = vmatpush1.msra.mxu0 0.0
    %182 = vmatprep.subr.mxu0 0.0
    %183 = vmatpush1.msra.mxu0 0.0
    %184 = vmatprep.mubr.f32.mxu0 0.0
    %185 = vmatmul.mubr.f32.gmra.mrb[0].mxu0 %v73
    %v186 = vpop.f32.mrb[0].mxu0
    %v187 = vadd.f32 %v69, %v186
    %v188 = vpop.f32.mrb[0].mxu0
    %189 = vmatprep.mubr.f32.mxu0 0.0
    %190 = vmatmul.mubr.f32.gmra.mrb[0].mxu0 %v76
    %v191 = vpop.f32.mrb[0].mxu0
    %v192 = vadd.f32 %v69, %v191
    %v193 = vpop.f32.mrb[0].mxu0
    %194 = vmatprep.mubr.f32.mxu0 0.0
    %195 = vmatmul.mubr.f32.gmra.mrb[0].mxu0 %v79
    %v196 = vpop.f32.mrb[0].mxu0
    %v197 = vadd.f32 %v69, %v196
    %v198 = vpop.f32.mrb[0].mxu0
    %199 = vmatprep.mubr.f32.mxu0 0.0
    %200 = vmatmul.mubr.f32.gmra.mrb[0].mxu0 %v82
    %v201 = vpop.f32.mrb[0].mxu0
    %v202 = vadd.f32 %v69, %v201
    %v203 = vpop.f32.mrb[0].mxu0
    %204 = vmatprep.mubr.f32.mxu0 0.0
    %205 = vmatmul.mubr.f32.gmra.mrb[0].mxu0 %v85
    %v206 = vpop.f32.mrb[0].mxu0
    %v207 = vadd.f32 %v69, %v206
    %v208 = vpop.f32.mrb[0].mxu0
    %209 = vmatprep.mubr.f32.mxu0 0.0
    %210 = vmatmul.mubr.f32.gmra.mrb[0].mxu0 %v88
    %v211 = vpop.f32.mrb[0].mxu0
    %v212 = vadd.f32 %v69, %v211
    %v213 = vpop.f32.mrb[0].mxu0
    %214 = vmatprep.mubr.f32.mxu0 0.0
    %215 = vmatmul.mubr.f32.gmra.mrb[0].mxu0 %v91
    %v216 = vpop.f32.mrb[0].mxu0
    %v217 = vadd.f32 %v69, %v216
    %v218 = vpop.f32.mrb[0].mxu0
    %219 = vmatprep.mubr.f32.mxu0 0.0
    %220 = vmatmul.mubr.f32.gmra.mrb[0].mxu0 %v94
    %v221 = vpop.f32.mrb[0].mxu0
    %v222 = vadd.f32 %v69, %v221
    %v223 = vpop.f32.mrb[0].mxu0
    %224 = vmatprep.mubr.f32.mxu0 0.0
    %225 = vmatmul.mubr.f32.gmra.mrb[0].mxu0 %v97
    %v226 = vpop.f32.mrb[0].mxu0
    %v227 = vadd.f32 %v69, %v226
    %v228 = vpop.f32.mrb[0].mxu0
    %229 = vmatprep.mubr.f32.mxu0 0.0
    %230 = vmatmul.mubr.f32.gmra.mrb[0].mxu0 %v100
    %v231 = vpop.f32.mrb[0].mxu0
    %v232 = vadd.f32 %v69, %v231
    %v233 = vpop.f32.mrb[0].mxu0
    %234 = vmatprep.mubr.f32.mxu0 0.0
    %235 = vmatmul.mubr.f32.gmra.mrb[0].mxu0 %v103
    %v236 = vpop.f32.mrb[0].mxu0
    %v237 = vadd.f32 %v69, %v236
    %v238 = vpop.f32.mrb[0].mxu0
    %239 = vmatprep.mubr.f32.mxu0 0.0
    %240 = vmatmul.mubr.f32.gmra.mrb[0].mxu0 %v106
    %v241 = vpop.f32.mrb[0].mxu0
    %v242 = vadd.f32 %v69, %v241
    %v243 = vpop.f32.mrb[0].mxu0
    %244 = vmatprep.mubr.f32.mxu0 0.0
    %245 = vmatmul.mubr.f32.gmra.mrb[0].mxu0 %v109
    %v246 = vpop.f32.mrb[0].mxu0
    %v247 = vadd.f32 %v69, %v246
    %v248 = vpop.f32.mrb[0].mxu0
    %249 = vmatprep.mubr.f32.mxu0 0.0
    %250 = vmatmul.mubr.f32.gmra.mrb[0].mxu0 %v112
    %v251 = vpop.f32.mrb[0].mxu0
    %v252 = vadd.f32 %v69, %v251
    %v253 = vpop.f32.mrb[0].mxu0
    %254 = vmatprep.mubr.f32.mxu0 0.0
    %255 = vmatmul.mubr.f32.gmra.mrb[0].mxu0 %v115
    %v256 = vpop.f32.mrb[0].mxu0
    %v257 = vadd.f32 %v69, %v256
    %v258 = vpop.f32.mrb[0].mxu0
    %259 = vmatprep.mubr.f32.mxu0 0.0
    %260 = vmatmul.mubr.f32.gmra.mrb[0].mxu0 %v118
    %v261 = vpop.f32.mrb[0].mxu0
    %v262 = vadd.f32 %v69, %v261
    %v263 = vpop.f32.mrb[0].mxu0
    %264 = vdwg.mxu0
    %v265 = vmax.f32 %v187, 0.0
    %v266 = vmax.f32 %v192, 0.0
    %v267 = vmax.f32 %v197, 0.0
    %v268 = vmax.f32 %v202, 0.0
    %v269 = vmax.f32 %v207, 0.0
    %v270 = vmax.f32 %v212, 0.0
    %v271 = vmax.f32 %v217, 0.0
    %v272 = vmax.f32 %v222, 0.0
    %v273 = vmax.f32 %v227, 0.0
    %v274 = vmax.f32 %v232, 0.0
    %v275 = vmax.f32 %v237, 0.0
    %v276 = vmax.f32 %v242, 0.0
    %v277 = vmax.f32 %v247, 0.0
    %v278 = vmax.f32 %v252, 0.0
    %v279 = vmax.f32 %v257, 0.0
    %v280 = vmax.f32 %v262, 0.0
    %v282 = vlaneseq
    %v283 = vshrl.u32 %v282, 7
    %v284 = vsub.s32 0, %v283
    %v285 = vrot.slane %v46, %v284
    %287 = vmatprep.subr.mxu0 0.0
    %288 = vmatpush1.msra.mxu0 %v30
    %289 = vmatprep.subr.mxu0 0.0
    %290 = vmatpush1.msra.mxu0 %v31
    %291 = vmatprep.subr.mxu0 0.0
    %292 = vmatpush1.msra.mxu0 %v32
    %293 = vmatprep.subr.mxu0 0.0
    %294 = vmatpush1.msra.mxu0 %v33
    %295 = vmatprep.subr.mxu0 0.0
    %296 = vmatpush1.msra.mxu0 %v34
    %297 = vmatprep.subr.mxu0 0.0
    %298 = vmatpush1.msra.mxu0 %v35
    %299 = vmatprep.subr.mxu0 0.0
    %300 = vmatpush1.msra.mxu0 %v36
    %301 = vmatprep.subr.mxu0 0.0
    %302 = vmatpush1.msra.mxu0 %v37
    %303 = vmatprep.subr.mxu0 0.0
    %304 = vmatpush1.msra.mxu0 %v38
    %305 = vmatprep.subr.mxu0 0.0
    %306 = vmatpush1.msra.mxu0 %v39
    %307 = vmatprep.subr.mxu0 0.0
    %308 = vmatpush1.msra.mxu0 %v40
    %309 = vmatprep.subr.mxu0 0.0
    %310 = vmatpush1.msra.mxu0 %v41
    %311 = vmatprep.subr.mxu0 0.0
    %312 = vmatpush1.msra.mxu0 %v42
    %313 = vmatprep.subr.mxu0 0.0
    %314 = vmatpush1.msra.mxu0 %v43
    %315 = vmatprep.subr.mxu0 0.0
    %316 = vmatpush1.msra.mxu0 %v44
    %317 = vmatprep.subr.mxu0 0.0
    %318 = vmatpush1.msra.mxu0 %v45
    %319 = vmatprep.subr.mxu0 0.0
    %320 = vmatpush1.msra.mxu0 0.0
    %321 = vmatprep.subr.mxu0 0.0
    %322 = vmatpush1.msra.mxu0 0.0
    %323 = vmatprep.subr.mxu0 0.0
    %324 = vmatpush1.msra.mxu0 0.0
    %325 = vmatprep.subr.mxu0 0.0
    %326 = vmatpush1.msra.mxu0 0.0
    %327 = vmatprep.subr.mxu0 0.0
    %328 = vmatpush1.msra.mxu0 0.0
    %329 = vmatprep.subr.mxu0 0.0
    %330 = vmatpush1.msra.mxu0 0.0
    %331 = vmatprep.subr.mxu0 0.0
    %332 = vmatpush1.msra.mxu0 0.0
    %333 = vmatprep.subr.mxu0 0.0
    %334 = vmatpush1.msra.mxu0 0.0
    %335 = vmatprep.subr.mxu0 0.0
    %336 = vmatpush1.msra.mxu0 0.0
    %337 = vmatprep.subr.mxu0 0.0
    %338 = vmatpush1.msra.mxu0 0.0
    %339 = vmatprep.subr.mxu0 0.0
    %340 = vmatpush1.msra.mxu0 0.0
    %341 = vmatprep.subr.mxu0 0.0
    %342 = vmatpush1.msra.mxu0 0.0
    %343 = vmatprep.subr.mxu0 0.0
    %344 = vmatpush1.msra.mxu0 0.0
    %345 = vmatprep.subr.mxu0 0.0
    %346 = vmatpush1.msra.mxu0 0.0
    %347 = vmatprep.subr.mxu0 0.0
    %348 = vmatpush1.msra.mxu0 0.0
    %349 = vmatprep.subr.mxu0 0.0
    %350 = vmatpush1.msra.mxu0 0.0
    %351 = vmatprep.mubr.f32.mxu0 0.0
    %352 = vmatmul.mubr.f32.gmra.mrb[0].mxu0 %v265
    %v353 = vpop.f32.mrb[0].mxu0
    %v354 = vadd.f32 %v285, %v353
    %v355 = vpop.f32.mrb[0].mxu0
    %356 = vmatprep.mubr.f32.mxu0 0.0
    %357 = vmatmul.mubr.f32.gmra.mrb[0].mxu0 %v266
    %v358 = vpop.f32.mrb[0].mxu0
    %v359 = vadd.f32 %v285, %v358
    %v360 = vpop.f32.mrb[0].mxu0
    %361 = vmatprep.mubr.f32.mxu0 0.0
    %362 = vmatmul.mubr.f32.gmra.mrb[0].mxu0 %v267
    %v363 = vpop.f32.mrb[0].mxu0
    %v364 = vadd.f32 %v285, %v363
    %v365 = vpop.f32.mrb[0].mxu0
    %366 = vmatprep.mubr.f32.mxu0 0.0
    %367 = vmatmul.mubr.f32.gmra.mrb[0].mxu0 %v268
    %v368 = vpop.f32.mrb[0].mxu0
    %v369 = vadd.f32 %v285, %v368
    %v370 = vpop.f32.mrb[0].mxu0
    %371 = vmatprep.mubr.f32.mxu0 0.0
    %372 = vmatmul.mubr.f32.gmra.mrb[0].mxu0 %v269
    %v373 = vpop.f32.mrb[0].mxu0
    %v374 = vadd.f32 %v285, %v373
    %v375 = vpop.f32.mrb[0].mxu0
    %376 = vmatprep.mubr.f32.mxu0 0.0
    %377 = vmatmul.mubr.f32.gmra.mrb[0].mxu0 %v270
    %v378 = vpop.f32.mrb[0].mxu0
    %v379 = vadd.f32 %v285, %v378
    %v380 = vpop.f32.mrb[0].mxu0
    %381 = vmatprep.mubr.f32.mxu0 0.0
    %382 = vmatmul.mubr.f32.gmra.mrb[0].mxu0 %v271
    %v383 = vpop.f32.mrb[0].mxu0
    %v384 = vadd.f32 %v285, %v383
    %v385 = vpop.f32.mrb[0].mxu0
    %386 = vmatprep.mubr.f32.mxu0 0.0
    %387 = vmatmul.mubr.f32.gmra.mrb[0].mxu0 %v272
    %v388 = vpop.f32.mrb[0].mxu0
    %v389 = vadd.f32 %v285, %v388
    %v390 = vpop.f32.mrb[0].mxu0
    %391 = vmatprep.mubr.f32.mxu0 0.0
    %392 = vmatmul.mubr.f32.gmra.mrb[0].mxu0 %v273
    %v393 = vpop.f32.mrb[0].mxu0
    %v394 = vadd.f32 %v285, %v393
    %v395 = vpop.f32.mrb[0].mxu0
    %396 = vmatprep.mubr.f32.mxu0 0.0
    %397 = vmatmul.mubr.f32.gmra.mrb[0].mxu0 %v274
    %v398 = vpop.f32.mrb[0].mxu0
    %v399 = vadd.f32 %v285, %v398
    %v400 = vpop.f32.mrb[0].mxu0
    %401 = vmatprep.mubr.f32.mxu0 0.0
    %402 = vmatmul.mubr.f32.gmra.mrb[0].mxu0 %v275
    %v403 = vpop.f32.mrb[0].mxu0
    %v404 = vadd.f32 %v285, %v403
    %v405 = vpop.f32.mrb[0].mxu0
    %406 = vmatprep.mubr.f32.mxu0 0.0
    %407 = vmatmul.mubr.f32.gmra.mrb[0].mxu0 %v276
    %v408 = vpop.f32.mrb[0].mxu0
    %v409 = vadd.f32 %v285, %v408
    %v410 = vpop.f32.mrb[0].mxu0
    %411 = vmatprep.mubr.f32.mxu0 0.0
    %412 = vmatmul.mubr.f32.gmra.mrb[0].mxu0 %v277
    %v413 = vpop.f32.mrb[0].mxu0
    %v414 = vadd.f32 %v285, %v413
    %v415 = vpop.f32.mrb[0].mxu0
    %416 = vmatprep.mubr.f32.mxu0 0.0
    %417 = vmatmul.mubr.f32.gmra.mrb[0].mxu0 %v278
    %v418 = vpop.f32.mrb[0].mxu0
    %v419 = vadd.f32 %v285, %v418
    %v420 = vpop.f32.mrb[0].mxu0
    %421 = vmatprep.mubr.f32.mxu0 0.0
    %422 = vmatmul.mubr.f32.gmra.mrb[0].mxu0 %v279
    %v423 = vpop.f32.mrb[0].mxu0
    %v424 = vadd.f32 %v285, %v423
    %v425 = vpop.f32.mrb[0].mxu0
    %426 = vmatprep.mubr.f32.mxu0 0.0
    %427 = vmatmul.mubr.f32.gmra.mrb[0].mxu0 %v280
    %v428 = vpop.f32.mrb[0].mxu0
    %v429 = vadd.f32 %v285, %v428
    %v430 = vpop.f32.mrb[0].mxu0
    %431 = vdwg.mxu0
    %v432 = vmax.f32 %v354, 0.0
    %v433 = vmax.f32 %v359, 0.0
    %v434 = vmax.f32 %v364, 0.0
    %v435 = vmax.f32 %v369, 0.0
    %v436 = vmax.f32 %v374, 0.0
    %v437 = vmax.f32 %v379, 0.0
    %v438 = vmax.f32 %v384, 0.0
    %v439 = vmax.f32 %v389, 0.0
    %v440 = vmax.f32 %v394, 0.0
    %v441 = vmax.f32 %v399, 0.0
    %v442 = vmax.f32 %v404, 0.0
    %v443 = vmax.f32 %v409, 0.0
    %v444 = vmax.f32 %v414, 0.0
    %v445 = vmax.f32 %v419, 0.0
    %v446 = vmax.f32 %v424, 0.0
    %v447 = vmax.f32 %v429, 0.0
    %449 = vset.pattern.permute.xlu0 0
    %450 = vperm.xlu0 %449, %v48
    %v451 = vpop.permute.xlu0 %450
    %vm453 = vcmask 523264
    %v455 = vsel %vm453, %v47, 0
    %v458 = vsel %vm453, %v432, 0
    %v461 = vsel %vm453, %v433, 0
    %v464 = vsel %vm453, %v434, 0
    %v467 = vsel %vm453, %v435, 0
    %v470 = vsel %vm453, %v436, 0
    %v473 = vsel %vm453, %v437, 0
    %v476 = vsel %vm453, %v438, 0
    %v479 = vsel %vm453, %v439, 0
    %v482 = vsel %vm453, %v440, 0
    %v485 = vsel %vm453, %v441, 0
    %v488 = vsel %vm453, %v442, 0
    %v491 = vsel %vm453, %v443, 0
    %v494 = vsel %vm453, %v444, 0
    %v497 = vsel %vm453, %v445, 0
    %v500 = vsel %vm453, %v446, 0
    %v503 = vsel %vm453, %v447, 0
    %505 = vmatprep.subr.mxu0 0.0
    %506 = vmatpush1.xpose.msra.mxu0 %v458
    %507 = vmatprep.subr.mxu0 0.0
    %508 = vmatpush1.xpose.msra.mxu0 %v461
    %509 = vmatprep.subr.mxu0 0.0
    %510 = vmatpush1.xpose.msra.mxu0 %v464
    %511 = vmatprep.subr.mxu0 0.0
    %512 = vmatpush1.xpose.msra.mxu0 %v467
    %513 = vmatprep.subr.mxu0 0.0
    %514 = vmatpush1.xpose.msra.mxu0 %v470
    %515 = vmatprep.subr.mxu0 0.0
    %516 = vmatpush1.xpose.msra.mxu0 %v473
    %517 = vmatprep.subr.mxu0 0.0
    %518 = vmatpush1.xpose.msra.mxu0 %v476
    %519 = vmatprep.subr.mxu0 0.0
    %520 = vmatpush1.xpose.msra.mxu0 %v479
    %521 = vmatprep.subr.mxu0 0.0
    %522 = vmatpush1.xpose.msra.mxu0 %v482
    %523 = vmatprep.subr.mxu0 0.0
    %524 = vmatpush1.xpose.msra.mxu0 %v485
    %525 = vmatprep.subr.mxu0 0.0
    %526 = vmatpush1.xpose.msra.mxu0 %v488
    %527 = vmatprep.subr.mxu0 0.0
    %528 = vmatpush1.xpose.msra.mxu0 %v491
    %529 = vmatprep.subr.mxu0 0.0
    %530 = vmatpush1.xpose.msra.mxu0 %v494
    %531 = vmatprep.subr.mxu0 0.0
    %532 = vmatpush1.xpose.msra.mxu0 %v497
    %533 = vmatprep.subr.mxu0 0.0
    %534 = vmatpush1.xpose.msra.mxu0 %v500
    %535 = vmatprep.subr.mxu0 0.0
    %536 = vmatpush1.xpose.msra.mxu0 %v503
    %537 = vmatprep.subr.mxu0 0.0
    %538 = vmatpush1.xpose.msra.mxu0 0.0
    %539 = vmatprep.subr.mxu0 0.0
    %540 = vmatpush1.xpose.msra.mxu0 0.0
    %541 = vmatprep.subr.mxu0 0.0
    %542 = vmatpush1.xpose.msra.mxu0 0.0
    %543 = vmatprep.subr.mxu0 0.0
    %544 = vmatpush1.xpose.msra.mxu0 0.0
    %545 = vmatprep.subr.mxu0 0.0
    %546 = vmatpush1.xpose.msra.mxu0 0.0
    %547 = vmatprep.subr.mxu0 0.0
    %548 = vmatpush1.xpose.msra.mxu0 0.0
    %549 = vmatprep.subr.mxu0 0.0
    %550 = vmatpush1.xpose.msra.mxu0 0.0
    %551 = vmatprep.subr.mxu0 0.0
    %552 = vmatpush1.xpose.msra.mxu0 0.0
    %553 = vmatprep.subr.mxu0 0.0
    %554 = vmatpush1.xpose.msra.mxu0 0.0
    %555 = vmatprep.subr.mxu0 0.0
    %556 = vmatpush1.xpose.msra.mxu0 0.0
    %557 = vmatprep.subr.mxu0 0.0
    %558 = vmatpush1.xpose.msra.mxu0 0.0
    %559 = vmatprep.subr.mxu0 0.0
    %560 = vmatpush1.xpose.msra.mxu0 0.0
    %561 = vmatprep.subr.mxu0 0.0
    %562 = vmatpush1.xpose.msra.mxu0 0.0
    %563 = vmatprep.subr.mxu0 0.0
    %564 = vmatpush1.xpose.msra.mxu0 0.0
    %565 = vmatprep.subr.mxu0 0.0
    %566 = vmatpush1.xpose.msra.mxu0 0.0
    %567 = vmatprep.subr.mxu0 0.0
    %568 = vmatpush1.xpose.msra.mxu0 0.0
    %569 = vmatprep.mubr.f32.mxu0 0.0
    %570 = vmatmul.mubr.f32.gmra.mrb[0].mxu0 %v455
    %v571 = vpop.f32.mrb[0].mxu0
    %v572 = vadd.f32 %v451, %v571
    %v573 = vpop.f32.mrb[0].mxu0
    %574 = vdwg.mxu0
    %575 = vst [vmem:[#allocation2] sm:$0xff] %v572
    // Predicated region
    $region30: #{tpu_custom_call.1} parent=1 // pred_check
      _
    $region31: #{tpu_custom_call.1} parent=1 // pred_check_branch
      %577 = sbr.rel (0) target = $region33
    $region32: #{tpu_custom_call.1} parent=1 // pred_region
      %s579 = ssub.s32 128, 128
      %580 = vsyncadd [#allocation3], %s579
      %s582 = sshll.u32 [#allocation2], 4
      %s583 = int_to_ptr.vmem [resolvable:$true] %s582
      %585 = dma.vmem_to_hbm [thread:$0]  %s583, 128, %s7, [#allocation3]
    $region33: #{tpu_custom_call.1} parent=1 // pred_fallthru
      _
    // Predicated region
    $region34: #{tpu_custom_call.1} parent=1 // pred_check
      _
    $region35: #{tpu_custom_call.1} parent=1 // pred_check_branch
      %587 = sbr.rel (0) target = $region37
    $region36: #{tpu_custom_call.1} parent=1 // pred_region
      %588 = dma.done [#allocation3], 128
    $region37: #{tpu_custom_call.1} parent=1 // pred_fallthru
      _
    %589 = vsyncpa [#allocation3], 1

</llo_original>
